<compile_context>
chip_gen: v6e
topology: v6e:2x2x1
jax: 0.10.0
libtpu: 0.0.40
codegen_flags: <defaults>
</compile_context>

<pallas_src>
import jax
import jax.numpy as jnp
import numpy as np
from jax.experimental import pallas as pl
from jax.experimental.pallas import tpu as pltpu


def _round_up(x, m):
    return ((x + m - 1) // m) * m


# ---------------------------------------------------------------------------
# Fused per-face kernel: transform + project the 3 gathered vertices, cross
# product, normalization, channel-first packing.
# ---------------------------------------------------------------------------
def _face_kernel(rot_ref, pos_ref, proj_ref, g_ref,
                 p3d_ref, p2d_ref, nz_ref, n1_ref):
    # rot_ref (B*9,), pos_ref (B*3,), proj_ref (3,): f32 scalars in SMEM.
    # g_ref (3, 3, TF): gathered vertex positions (xyz, vertex, face) in VMEM.
    # Outputs (channel-first): p3d (9,TF), p2d (6,TF), nz (1,TF), n1 (3,TF).
    b = pl.program_id(0)

    r = [[rot_ref[9 * b + 3 * i + j] for j in range(3)] for i in range(3)]
    t = [pos_ref[3 * b + i] for i in range(3)]
    pj = [proj_ref[i] for i in range(3)]

    pcam = []                                      # pcam[k][i]: (1, TF) rows
    for k in range(3):                             # 3 vertices of each face
        x = g_ref[0, k:k + 1, :] - t[0]
        y = g_ref[1, k:k + 1, :] - t[1]
        z = g_ref[2, k:k + 1, :] - t[2]
        ck = [r[i][0] * x + r[i][1] * y + r[i][2] * z for i in range(3)]
        for i in range(3):                         # store rows directly
            p3d_ref[3 * k + i:3 * k + i + 1, :] = ck[i]
        inv_z = pl.reciprocal(ck[2] * pj[2], approx=False)   # EUP path
        p2d_ref[2 * k + 0:2 * k + 1, :] = (ck[0] * pj[0]) * inv_z
        p2d_ref[2 * k + 1:2 * k + 2, :] = (ck[1] * pj[1]) * inv_z
        pcam.append(ck)

    v01 = [pcam[1][i] - pcam[0][i] for i in range(3)]
    v02 = [pcam[2][i] - pcam[0][i] for i in range(3)]
    cx = v01[1] * v02[2] - v01[2] * v02[1]
    cy = v01[2] * v02[0] - v01[0] * v02[2]
    cz = v01[0] * v02[1] - v01[1] * v02[0]
    nz_ref[...] = cz
    inv_len = pl.reciprocal(jnp.sqrt(cx * cx + cy * cy + cz * cz) + 1e-15,
                            approx=False)
    n1_ref[0:1, :] = cx * inv_len
    n1_ref[1:2, :] = cy * inv_len
    n1_ref[2:3, :] = cz * inv_len


# ---------------------------------------------------------------------------
# Full forward (matches RenderMeshColor.forward semantics)
# ---------------------------------------------------------------------------
def render_mesh_color_forward(points_bxpx3, tfcolor_bxpx3, faces_1xfx3,
                              cameras_1, cameras_2, cameras_3,
                              func=None, face_tile=None):
    if func is None:
        # TODO(synk): `self.func` is an external rasterizer (custom op); pass
        # its four inputs through unchanged instead of faking its output.
        func = lambda *args: args

    B, P, _ = points_bxpx3.shape
    faces = faces_1xfx3[0].astype(jnp.int32)                 # (F, 3)
    F = faces.shape[0]

    if face_tile is None:
        TF = min(8192, _round_up(F, 128))                    # lane-dense tile
    else:
        TF = int(face_tile)
    assert TF % 128 == 0
    F_pad = _round_up(F, TF)
    n_f = F_pad // TF

    # Pad faces with vertex 0 so every tile indexes valid points.
    faces_pad = jnp.pad(faces, ((0, F_pad - F), (0, 0)))

    # One collapsed gather of all three vertices of every face:
    #   g4[b, c, k, f] = points[b, faces_pad[f, k], c]
    points_T = jnp.transpose(points_bxpx3, (0, 2, 1)).astype(jnp.float32)
    g4 = jnp.take(points_T, faces_pad.T, axis=2)             # (B, 3, 3, F_pad)

    rot_flat = cameras_1.reshape(B * 9).astype(jnp.float32)
    pos_flat = cameras_2.reshape(B * 3).astype(jnp.float32)
    proj_flat = cameras_3.reshape(-1)[:3].astype(jnp.float32)

    smem = pl.BlockSpec(memory_space=pltpu.MemorySpace.SMEM)
    p3d_T, p2d_T, nz_T, n1_T = pl.pallas_call(
        _face_kernel,
        out_shape=(jax.ShapeDtypeStruct((B, 9, F_pad), jnp.float32),
                   jax.ShapeDtypeStruct((B, 6, F_pad), jnp.float32),
                   jax.ShapeDtypeStruct((B, 1, F_pad), jnp.float32),
                   jax.ShapeDtypeStruct((B, 3, F_pad), jnp.float32)),
        grid=(B, n_f),
        in_specs=[smem, smem, smem,
                  pl.BlockSpec((None, 3, 3, TF), lambda b, f: (b, 0, 0, f))],
        out_specs=(pl.BlockSpec((None, 9, TF), lambda b, f: (b, 0, f)),
                   pl.BlockSpec((None, 6, TF), lambda b, f: (b, 0, f)),
                   pl.BlockSpec((None, 1, TF), lambda b, f: (b, 0, f)),
                   pl.BlockSpec((None, 3, TF), lambda b, f: (b, 0, f))),
        compiler_params=pltpu.CompilerParams(
            dimension_semantics=("parallel", "parallel")),
    )(rot_flat, pos_flat, proj_flat, g4)

    # Channel-first kernel output -> required (B, F, C) layout.
    tr = lambda x: jnp.transpose(x, (0, 2, 1))[:, :F, :]
    points3d_bxfx9 = tr(p3d_T)
    points2d_bxfx6 = tr(p2d_T)
    normalz_bxfx1 = tr(nz_T)
    normal1_bxfx3 = tr(n1_T)

    # Colors: one collapsed gather + reshape/transpose (pure XLA glue).
    idx_all = jnp.concatenate([faces[:, 0], faces[:, 1], faces[:, 2]])
    col = jnp.take(tfcolor_bxpx3, idx_all, axis=1)           # (B, 3F, 3)
    tfcolor_bxfx9 = (col.reshape(B, 3, F, 3)
                        .transpose(0, 2, 1, 3)
                        .reshape(B, F, 9))

    return (func(points3d_bxfx9, points2d_bxfx6, normalz_bxfx1, tfcolor_bxfx9),
            normal1_bxfx3)


# ---------------------------------------------------------------------------
# Pure-JAX reference (mirrors the PyTorch p2f / forward) for validation
# ---------------------------------------------------------------------------
def reference_forward(points, tfcolor, faces_1xfx3, rot, pos, proj_1x3x1):
    faces = faces_1xfx3[0]
    proj = proj_1x3x1.reshape(-1)[:3]
    p = points - pos[:, None, :]
    px, py, pz = p[..., 0], p[..., 1], p[..., 2]
    pcam = jnp.stack(
        [rot[:, None, i, 0] * px + rot[:, None, i, 1] * py
         + rot[:, None, i, 2] * pz for i in range(3)], axis=-1)  # (B, P, 3)
    xyz = pcam * proj.reshape(1, 1, 3)
    xy = xyz[..., :2] / xyz[..., 2:3]
    pf0 = pcam[:, faces[:, 0], :]
    pf1 = pcam[:, faces[:, 1], :]
    pf2 = pcam[:, faces[:, 2], :]
    points3d = jnp.concatenate([pf0, pf1, pf2], axis=2)
    points2d = jnp.concatenate([xy[:, faces[:, 0], :],
                                xy[:, faces[:, 1], :],
                                xy[:, faces[:, 2], :]], axis=2)
    normal = jnp.cross(pf1 - pf0, pf2 - pf0, axis=2)
    normalz = normal[:, :, 2:3]
    nlen = jnp.sqrt(jnp.sum(normal ** 2, axis=2, keepdims=True))
    normal1 = normal / (nlen + 1e-15)
    c0 = tfcolor[:, faces[:, 0], :]
    c1 = tfcolor[:, faces[:, 1], :]
    c2 = tfcolor[:, faces[:, 2], :]
    tfcolor9 = jnp.concatenate([c0, c1, c2], axis=2)
    return (points3d, points2d, normalz, tfcolor9), normal1


def _run_and_check(key, B, P, F, face_tile=None, tag=""):
    k1, k2, k3, k4, k5, k6 = jax.random.split(key, 6)
    points = jax.random.uniform(k1, (B, P, 3), jnp.float32, 0.5, 1.5)
    tfcolor = jax.random.uniform(k2, (B, P, 3), jnp.float32)
    faces = jax.random.randint(k3, (1, F, 3), 0, P, dtype=jnp.int32)
    rot = (jnp.tile(jnp.eye(3, dtype=jnp.float32)[None], (B, 1, 1))
           + 0.05 * jax.random.normal(k4, (B, 3, 3), jnp.float32))
    pos = 0.1 * jax.random.normal(k5, (B, 3), jnp.float32)
    proj = jax.random.uniform(k6, (1, 3, 1), jnp.float32, 0.5, 1.5)

    (p3d, p2d, nz, col9), n1 = render_mesh_color_forward(
        points, tfcolor, faces, rot, pos, proj, face_tile=face_tile)
    jax.block_until_ready((p3d, p2d, nz, col9, n1))

    (rp3d, rp2d, rnz, rcol9), rn1 = reference_forward(
        points, tfcolor, faces, rot, pos, proj)

    for name, got, want in [("points3d", p3d, rp3d), ("points2d", p2d, rp2d),
                            ("normalz", nz, rnz), ("tfcolor9", col9, rcol9)]:
        np.testing.assert_allclose(np.asarray(got), np.asarray(want),
                                   rtol=1e-5, atol=1e-5,
                                   err_msg=f"{tag}:{name}")

    # normal1 of (near-)degenerate faces is ill-conditioned (normalizing a
    # ~zero vector); the cross product itself is already validated on every
    # face via normalz / points3d, so compare normal1 only where the face has
    # non-negligible area.
    pf0 = np.asarray(rp3d[..., 0:3])
    pf1 = np.asarray(rp3d[..., 3:6])
    pf2 = np.asarray(rp3d[..., 6:9])
    area = np.linalg.norm(np.cross(pf1 - pf0, pf2 - pf0), axis=-1)
    mask = area > 1e-4
    np.testing.assert_allclose(np.asarray(n1)[mask], np.asarray(rn1)[mask],
                               rtol=1e-5, atol=1e-5,
                               err_msg=f"{tag}:normal1")


if __name__ == "__main__":
    key = jax.random.PRNGKey(0)
    ka, kb = jax.random.split(key)
    # Small shapes (single face tile).
    _run_and_check(ka, B=2, P=16, F=8, tag="small")
    # Multi-tile + face padding path (F not a multiple of the tile).
    _run_and_check(kb, B=1, P=100, F=300, face_tile=128, tag="tiled")
    print("KERNEL_OK")
</pallas_src>

<mosaic_0001>
module attributes {stable_mosaic.version = 11 : i64} {
  func.func @_face_kernel(%arg0: i32, %arg1: i32, %arg2: memref<18xf32, #tpu.memory_space<smem>>, %arg3: memref<6xf32, #tpu.memory_space<smem>>, %arg4: memref<3xf32, #tpu.memory_space<smem>>, %arg5: memref<1x3x3x128xf32, #tpu.memory_space<vmem>>, %arg6: memref<1x9x128xf32, #tpu.memory_space<vmem>>, %arg7: memref<1x6x128xf32, #tpu.memory_space<vmem>>, %arg8: memref<1x1x128xf32, #tpu.memory_space<vmem>>, %arg9: memref<1x3x128xf32, #tpu.memory_space<vmem>>) attributes {dimension_semantics = [#tpu.dimension_semantics<parallel>, #tpu.dimension_semantics<parallel>], iteration_bounds = array<i64: 2, 1>, scalar_prefetch = 0 : i64, scratch_operands = 0 : i64, tpu.core_type = #tpu.core_type<tc>, window_params = [{transform_indices = @transform_0, window_bounds = array<i64: 18>}, {transform_indices = @transform_1, window_bounds = array<i64: 6>}, {transform_indices = @transform_2, window_bounds = array<i64: 3>}, {transform_indices = @transform_3, window_bounds = array<i64: 1, 3, 3, 128>}, {transform_indices = @transform_4, window_bounds = array<i64: 1, 9, 128>}, {transform_indices = @transform_5, window_bounds = array<i64: 1, 6, 128>}, {transform_indices = @transform_6, window_bounds = array<i64: 1, 1, 128>}, {transform_indices = @transform_7, window_bounds = array<i64: 1, 3, 128>}]} {
    %c9_i32 = arith.constant 9 : i32
    %0 = arith.muli %c9_i32, %arg0 : i32
    %c0_i32 = arith.constant 0 : i32
    %1 = arith.addi %0, %c0_i32 : i32
    %c0_i32_0 = arith.constant 0 : i32
    %2 = arith.addi %1, %c0_i32_0 : i32
    %3 = arith.index_cast %2 : i32 to index
    %4 = memref.load %arg2[%3] : memref<18xf32, #tpu.memory_space<smem>>
    %c9_i32_1 = arith.constant 9 : i32
    %5 = arith.muli %c9_i32_1, %arg0 : i32
    %c0_i32_2 = arith.constant 0 : i32
    %6 = arith.addi %5, %c0_i32_2 : i32
    %c1_i32 = arith.constant 1 : i32
    %7 = arith.addi %6, %c1_i32 : i32
    %8 = arith.index_cast %7 : i32 to index
    %9 = memref.load %arg2[%8] : memref<18xf32, #tpu.memory_space<smem>>
    %c9_i32_3 = arith.constant 9 : i32
    %10 = arith.muli %c9_i32_3, %arg0 : i32
    %c0_i32_4 = arith.constant 0 : i32
    %11 = arith.addi %10, %c0_i32_4 : i32
    %c2_i32 = arith.constant 2 : i32
    %12 = arith.addi %11, %c2_i32 : i32
    %13 = arith.index_cast %12 : i32 to index
    %14 = memref.load %arg2[%13] : memref<18xf32, #tpu.memory_space<smem>>
    %c9_i32_5 = arith.constant 9 : i32
    %15 = arith.muli %c9_i32_5, %arg0 : i32
    %c3_i32 = arith.constant 3 : i32
    %16 = arith.addi %15, %c3_i32 : i32
    %c0_i32_6 = arith.constant 0 : i32
    %17 = arith.addi %16, %c0_i32_6 : i32
    %18 = arith.index_cast %17 : i32 to index
    %19 = memref.load %arg2[%18] : memref<18xf32, #tpu.memory_space<smem>>
    %c9_i32_7 = arith.constant 9 : i32
    %20 = arith.muli %c9_i32_7, %arg0 : i32
    %c3_i32_8 = arith.constant 3 : i32
    %21 = arith.addi %20, %c3_i32_8 : i32
    %c1_i32_9 = arith.constant 1 : i32
    %22 = arith.addi %21, %c1_i32_9 : i32
    %23 = arith.index_cast %22 : i32 to index
    %24 = memref.load %arg2[%23] : memref<18xf32, #tpu.memory_space<smem>>
    %c9_i32_10 = arith.constant 9 : i32
    %25 = arith.muli %c9_i32_10, %arg0 : i32
    %c3_i32_11 = arith.constant 3 : i32
    %26 = arith.addi %25, %c3_i32_11 : i32
    %c2_i32_12 = arith.constant 2 : i32
    %27 = arith.addi %26, %c2_i32_12 : i32
    %28 = arith.index_cast %27 : i32 to index
    %29 = memref.load %arg2[%28] : memref<18xf32, #tpu.memory_space<smem>>
    %c9_i32_13 = arith.constant 9 : i32
    %30 = arith.muli %c9_i32_13, %arg0 : i32
    %c6_i32 = arith.constant 6 : i32
    %31 = arith.addi %30, %c6_i32 : i32
    %c0_i32_14 = arith.constant 0 : i32
    %32 = arith.addi %31, %c0_i32_14 : i32
    %33 = arith.index_cast %32 : i32 to index
    %34 = memref.load %arg2[%33] : memref<18xf32, #tpu.memory_space<smem>>
    %c9_i32_15 = arith.constant 9 : i32
    %35 = arith.muli %c9_i32_15, %arg0 : i32
    %c6_i32_16 = arith.constant 6 : i32
    %36 = arith.addi %35, %c6_i32_16 : i32
    %c1_i32_17 = arith.constant 1 : i32
    %37 = arith.addi %36, %c1_i32_17 : i32
    %38 = arith.index_cast %37 : i32 to index
    %39 = memref.load %arg2[%38] : memref<18xf32, #tpu.memory_space<smem>>
    %c9_i32_18 = arith.constant 9 : i32
    %40 = arith.muli %c9_i32_18, %arg0 : i32
    %c6_i32_19 = arith.constant 6 : i32
    %41 = arith.addi %40, %c6_i32_19 : i32
    %c2_i32_20 = arith.constant 2 : i32
    %42 = arith.addi %41, %c2_i32_20 : i32
    %43 = arith.index_cast %42 : i32 to index
    %44 = memref.load %arg2[%43] : memref<18xf32, #tpu.memory_space<smem>>
    %c3_i32_21 = arith.constant 3 : i32
    %45 = arith.muli %c3_i32_21, %arg0 : i32
    %c0_i32_22 = arith.constant 0 : i32
    %46 = arith.addi %45, %c0_i32_22 : i32
    %47 = arith.index_cast %46 : i32 to index
    %48 = memref.load %arg3[%47] : memref<6xf32, #tpu.memory_space<smem>>
    %c3_i32_23 = arith.constant 3 : i32
    %49 = arith.muli %c3_i32_23, %arg0 : i32
    %c1_i32_24 = arith.constant 1 : i32
    %50 = arith.addi %49, %c1_i32_24 : i32
    %51 = arith.index_cast %50 : i32 to index
    %52 = memref.load %arg3[%51] : memref<6xf32, #tpu.memory_space<smem>>
    %c3_i32_25 = arith.constant 3 : i32
    %53 = arith.muli %c3_i32_25, %arg0 : i32
    %c2_i32_26 = arith.constant 2 : i32
    %54 = arith.addi %53, %c2_i32_26 : i32
    %55 = arith.index_cast %54 : i32 to index
    %56 = memref.load %arg3[%55] : memref<6xf32, #tpu.memory_space<smem>>
    %c0 = arith.constant 0 : index
    %57 = memref.load %arg4[%c0] : memref<3xf32, #tpu.memory_space<smem>>
    %c1 = arith.constant 1 : index
    %58 = memref.load %arg4[%c1] : memref<3xf32, #tpu.memory_space<smem>>
    %c2 = arith.constant 2 : index
    %59 = memref.load %arg4[%c2] : memref<3xf32, #tpu.memory_space<smem>>
    %c0_27 = arith.constant 0 : index
    %c0_28 = arith.constant 0 : index
    %c0_29 = arith.constant 0 : index
    %c0_30 = arith.constant 0 : index
    %60 = vector.load %arg5[%c0_27, %c0_28, %c0_29, %c0_30] : memref<1x3x3x128xf32, #tpu.memory_space<vmem>>, vector<1x1x1x128xf32>
    %61 = vector.shape_cast %60 : vector<1x1x1x128xf32> to vector<1x128xf32>
    %62 = vector.broadcast %48 : f32 to vector<1x128xf32>
    %63 = arith.subf %61, %62 : vector<1x128xf32>
    %c0_31 = arith.constant 0 : index
    %c1_32 = arith.constant 1 : index
    %c0_33 = arith.constant 0 : index
    %c0_34 = arith.constant 0 : index
    %64 = vector.load %arg5[%c0_31, %c1_32, %c0_33, %c0_34] : memref<1x3x3x128xf32, #tpu.memory_space<vmem>>, vector<1x1x1x128xf32>
    %65 = vector.shape_cast %64 : vector<1x1x1x128xf32> to vector<1x128xf32>
    %66 = vector.broadcast %52 : f32 to vector<1x128xf32>
    %67 = arith.subf %65, %66 : vector<1x128xf32>
    %c0_35 = arith.constant 0 : index
    %c2_36 = arith.constant 2 : index
    %c0_37 = arith.constant 0 : index
    %c0_38 = arith.constant 0 : index
    %68 = vector.load %arg5[%c0_35, %c2_36, %c0_37, %c0_38] : memref<1x3x3x128xf32, #tpu.memory_space<vmem>>, vector<1x1x1x128xf32>
    %69 = vector.shape_cast %68 : vector<1x1x1x128xf32> to vector<1x128xf32>
    %70 = vector.broadcast %56 : f32 to vector<1x128xf32>
    %71 = arith.subf %69, %70 : vector<1x128xf32>
    %72 = vector.broadcast %4 : f32 to vector<1x128xf32>
    %73 = arith.mulf %72, %63 : vector<1x128xf32>
    %74 = vector.broadcast %9 : f32 to vector<1x128xf32>
    %75 = arith.mulf %74, %67 : vector<1x128xf32>
    %76 = arith.addf %73, %75 : vector<1x128xf32>
    %77 = vector.broadcast %14 : f32 to vector<1x128xf32>
    %78 = arith.mulf %77, %71 : vector<1x128xf32>
    %79 = arith.addf %76, %78 : vector<1x128xf32>
    %80 = vector.broadcast %19 : f32 to vector<1x128xf32>
    %81 = arith.mulf %80, %63 : vector<1x128xf32>
    %82 = vector.broadcast %24 : f32 to vector<1x128xf32>
    %83 = arith.mulf %82, %67 : vector<1x128xf32>
    %84 = arith.addf %81, %83 : vector<1x128xf32>
    %85 = vector.broadcast %29 : f32 to vector<1x128xf32>
    %86 = arith.mulf %85, %71 : vector<1x128xf32>
    %87 = arith.addf %84, %86 : vector<1x128xf32>
    %88 = vector.broadcast %34 : f32 to vector<1x128xf32>
    %89 = arith.mulf %88, %63 : vector<1x128xf32>
    %90 = vector.broadcast %39 : f32 to vector<1x128xf32>
    %91 = arith.mulf %90, %67 : vector<1x128xf32>
    %92 = arith.addf %89, %91 : vector<1x128xf32>
    %93 = vector.broadcast %44 : f32 to vector<1x128xf32>
    %94 = arith.mulf %93, %71 : vector<1x128xf32>
    %95 = arith.addf %92, %94 : vector<1x128xf32>
    %c0_39 = arith.constant 0 : index
    %c0_40 = arith.constant 0 : index
    %c0_41 = arith.constant 0 : index
    %96 = vector.load %arg6[%c0_39, %c0_40, %c0_41] : memref<1x9x128xf32, #tpu.memory_space<vmem>>, vector<1x1x128xf32>
    %97 = vector.shape_cast %96 : vector<1x1x128xf32> to vector<1x128xf32>
    %98 = vector.shape_cast %79 : vector<1x128xf32> to vector<1x1x128xf32>
    tpu.vector_store %arg6[%c0_39, %c0_40, %c0_41], %98 {strides = array<i32>} : memref<1x9x128xf32, #tpu.memory_space<vmem>>, vector<1x1x128xf32>,
    %c0_42 = arith.constant 0 : index
    %c1_43 = arith.constant 1 : index
    %c0_44 = arith.constant 0 : index
    %99 = vector.load %arg6[%c0_42, %c1_43, %c0_44] : memref<1x9x128xf32, #tpu.memory_space<vmem>>, vector<1x1x128xf32>
    %100 = vector.shape_cast %99 : vector<1x1x128xf32> to vector<1x128xf32>
    %101 = vector.shape_cast %87 : vector<1x128xf32> to vector<1x1x128xf32>
    tpu.vector_store %arg6[%c0_42, %c1_43, %c0_44], %101 {strides = array<i32>} : memref<1x9x128xf32, #tpu.memory_space<vmem>>, vector<1x1x128xf32>,
    %c0_45 = arith.constant 0 : index
    %c2_46 = arith.constant 2 : index
    %c0_47 = arith.constant 0 : index
    %102 = vector.load %arg6[%c0_45, %c2_46, %c0_47] : memref<1x9x128xf32, #tpu.memory_space<vmem>>, vector<1x1x128xf32>
    %103 = vector.shape_cast %102 : vector<1x1x128xf32> to vector<1x128xf32>
    %104 = vector.shape_cast %95 : vector<1x128xf32> to vector<1x1x128xf32>
    tpu.vector_store %arg6[%c0_45, %c2_46, %c0_47], %104 {strides = array<i32>} : memref<1x9x128xf32, #tpu.memory_space<vmem>>, vector<1x1x128xf32>,
    %105 = vector.broadcast %59 : f32 to vector<1x128xf32>
    %106 = arith.mulf %95, %105 : vector<1x128xf32>
    %107 = tpu.reciprocal %106 : vector<1x128xf32> -> vector<1x128xf32>
    %108 = vector.broadcast %57 : f32 to vector<1x128xf32>
    %109 = arith.mulf %79, %108 : vector<1x128xf32>
    %110 = arith.mulf %109, %107 : vector<1x128xf32>
    %c0_48 = arith.constant 0 : index
    %c0_49 = arith.constant 0 : index
    %c0_50 = arith.constant 0 : index
    %111 = vector.load %arg7[%c0_48, %c0_49, %c0_50] : memref<1x6x128xf32, #tpu.memory_space<vmem>>, vector<1x1x128xf32>
    %112 = vector.shape_cast %111 : vector<1x1x128xf32> to vector<1x128xf32>
    %113 = vector.shape_cast %110 : vector<1x128xf32> to vector<1x1x128xf32>
    tpu.vector_store %arg7[%c0_48, %c0_49, %c0_50], %113 {strides = array<i32>} : memref<1x6x128xf32, #tpu.memory_space<vmem>>, vector<1x1x128xf32>,
    %114 = vector.broadcast %58 : f32 to vector<1x128xf32>
    %115 = arith.mulf %87, %114 : vector<1x128xf32>
    %116 = arith.mulf %115, %107 : vector<1x128xf32>
    %c0_51 = arith.constant 0 : index
    %c1_52 = arith.constant 1 : index
    %c0_53 = arith.constant 0 : index
    %117 = vector.load %arg7[%c0_51, %c1_52, %c0_53] : memref<1x6x128xf32, #tpu.memory_space<vmem>>, vector<1x1x128xf32>
    %118 = vector.shape_cast %117 : vector<1x1x128xf32> to vector<1x128xf32>
    %119 = vector.shape_cast %116 : vector<1x128xf32> to vector<1x1x128xf32>
    tpu.vector_store %arg7[%c0_51, %c1_52, %c0_53], %119 {strides = array<i32>} : memref<1x6x128xf32, #tpu.memory_space<vmem>>, vector<1x1x128xf32>,
    %c0_54 = arith.constant 0 : index
    %c0_55 = arith.constant 0 : index
    %c1_56 = arith.constant 1 : index
    %c0_57 = arith.constant 0 : index
    %120 = vector.load %arg5[%c0_54, %c0_55, %c1_56, %c0_57] : memref<1x3x3x128xf32, #tpu.memory_space<vmem>>, vector<1x1x1x128xf32>
    %121 = vector.shape_cast %120 : vector<1x1x1x128xf32> to vector<1x128xf32>
    %122 = vector.broadcast %48 : f32 to vector<1x128xf32>
    %123 = arith.subf %121, %122 : vector<1x128xf32>
    %c0_58 = arith.constant 0 : index
    %c1_59 = arith.constant 1 : index
    %c1_60 = arith.constant 1 : index
    %c0_61 = arith.constant 0 : index
    %124 = vector.load %arg5[%c0_58, %c1_59, %c1_60, %c0_61] : memref<1x3x3x128xf32, #tpu.memory_space<vmem>>, vector<1x1x1x128xf32>
    %125 = vector.shape_cast %124 : vector<1x1x1x128xf32> to vector<1x128xf32>
    %126 = vector.broadcast %52 : f32 to vector<1x128xf32>
    %127 = arith.subf %125, %126 : vector<1x128xf32>
    %c0_62 = arith.constant 0 : index
    %c2_63 = arith.constant 2 : index
    %c1_64 = arith.constant 1 : index
    %c0_65 = arith.constant 0 : index
    %128 = vector.load %arg5[%c0_62, %c2_63, %c1_64, %c0_65] : memref<1x3x3x128xf32, #tpu.memory_space<vmem>>, vector<1x1x1x128xf32>
    %129 = vector.shape_cast %128 : vector<1x1x1x128xf32> to vector<1x128xf32>
    %130 = vector.broadcast %56 : f32 to vector<1x128xf32>
    %131 = arith.subf %129, %130 : vector<1x128xf32>
    %132 = vector.broadcast %4 : f32 to vector<1x128xf32>
    %133 = arith.mulf %132, %123 : vector<1x128xf32>
    %134 = vector.broadcast %9 : f32 to vector<1x128xf32>
    %135 = arith.mulf %134, %127 : vector<1x128xf32>
    %136 = arith.addf %133, %135 : vector<1x128xf32>
    %137 = vector.broadcast %14 : f32 to vector<1x128xf32>
    %138 = arith.mulf %137, %131 : vector<1x128xf32>
    %139 = arith.addf %136, %138 : vector<1x128xf32>
    %140 = vector.broadcast %19 : f32 to vector<1x128xf32>
    %141 = arith.mulf %140, %123 : vector<1x128xf32>
    %142 = vector.broadcast %24 : f32 to vector<1x128xf32>
    %143 = arith.mulf %142, %127 : vector<1x128xf32>
    %144 = arith.addf %141, %143 : vector<1x128xf32>
    %145 = vector.broadcast %29 : f32 to vector<1x128xf32>
    %146 = arith.mulf %145, %131 : vector<1x128xf32>
    %147 = arith.addf %144, %146 : vector<1x128xf32>
    %148 = vector.broadcast %34 : f32 to vector<1x128xf32>
    %149 = arith.mulf %148, %123 : vector<1x128xf32>
    %150 = vector.broadcast %39 : f32 to vector<1x128xf32>
    %151 = arith.mulf %150, %127 : vector<1x128xf32>
    %152 = arith.addf %149, %151 : vector<1x128xf32>
    %153 = vector.broadcast %44 : f32 to vector<1x128xf32>
    %154 = arith.mulf %153, %131 : vector<1x128xf32>
    %155 = arith.addf %152, %154 : vector<1x128xf32>
    %c0_66 = arith.constant 0 : index
    %c3 = arith.constant 3 : index
    %c0_67 = arith.constant 0 : index
    %156 = vector.load %arg6[%c0_66, %c3, %c0_67] : memref<1x9x128xf32, #tpu.memory_space<vmem>>, vector<1x1x128xf32>
    %157 = vector.shape_cast %156 : vector<1x1x128xf32> to vector<1x128xf32>
    %158 = vector.shape_cast %139 : vector<1x128xf32> to vector<1x1x128xf32>
    tpu.vector_store %arg6[%c0_66, %c3, %c0_67], %158 {strides = array<i32>} : memref<1x9x128xf32, #tpu.memory_space<vmem>>, vector<1x1x128xf32>,
    %c0_68 = arith.constant 0 : index
    %c4 = arith.constant 4 : index
    %c0_69 = arith.constant 0 : index
    %159 = vector.load %arg6[%c0_68, %c4, %c0_69] : memref<1x9x128xf32, #tpu.memory_space<vmem>>, vector<1x1x128xf32>
    %160 = vector.shape_cast %159 : vector<1x1x128xf32> to vector<1x128xf32>
    %161 = vector.shape_cast %147 : vector<1x128xf32> to vector<1x1x128xf32>
    tpu.vector_store %arg6[%c0_68, %c4, %c0_69], %161 {strides = array<i32>} : memref<1x9x128xf32, #tpu.memory_space<vmem>>, vector<1x1x128xf32>,
    %c0_70 = arith.constant 0 : index
    %c5 = arith.constant 5 : index
    %c0_71 = arith.constant 0 : index
    %162 = vector.load %arg6[%c0_70, %c5, %c0_71] : memref<1x9x128xf32, #tpu.memory_space<vmem>>, vector<1x1x128xf32>
    %163 = vector.shape_cast %162 : vector<1x1x128xf32> to vector<1x128xf32>
    %164 = vector.shape_cast %155 : vector<1x128xf32> to vector<1x1x128xf32>
    tpu.vector_store %arg6[%c0_70, %c5, %c0_71], %164 {strides = array<i32>} : memref<1x9x128xf32, #tpu.memory_space<vmem>>, vector<1x1x128xf32>,
    %165 = vector.broadcast %59 : f32 to vector<1x128xf32>
    %166 = arith.mulf %155, %165 : vector<1x128xf32>
    %167 = tpu.reciprocal %166 : vector<1x128xf32> -> vector<1x128xf32>
    %168 = vector.broadcast %57 : f32 to vector<1x128xf32>
    %169 = arith.mulf %139, %168 : vector<1x128xf32>
    %170 = arith.mulf %169, %167 : vector<1x128xf32>
    %c0_72 = arith.constant 0 : index
    %c2_73 = arith.constant 2 : index
    %c0_74 = arith.constant 0 : index
    %171 = vector.load %arg7[%c0_72, %c2_73, %c0_74] : memref<1x6x128xf32, #tpu.memory_space<vmem>>, vector<1x1x128xf32>
    %172 = vector.shape_cast %171 : vector<1x1x128xf32> to vector<1x128xf32>
    %173 = vector.shape_cast %170 : vector<1x128xf32> to vector<1x1x128xf32>
    tpu.vector_store %arg7[%c0_72, %c2_73, %c0_74], %173 {strides = array<i32>} : memref<1x6x128xf32, #tpu.memory_space<vmem>>, vector<1x1x128xf32>,
    %174 = vector.broadcast %58 : f32 to vector<1x128xf32>
    %175 = arith.mulf %147, %174 : vector<1x128xf32>
    %176 = arith.mulf %175, %167 : vector<1x128xf32>
    %c0_75 = arith.constant 0 : index
    %c3_76 = arith.constant 3 : index
    %c0_77 = arith.constant 0 : index
    %177 = vector.load %arg7[%c0_75, %c3_76, %c0_77] : memref<1x6x128xf32, #tpu.memory_space<vmem>>, vector<1x1x128xf32>
    %178 = vector.shape_cast %177 : vector<1x1x128xf32> to vector<1x128xf32>
    %179 = vector.shape_cast %176 : vector<1x128xf32> to vector<1x1x128xf32>
    tpu.vector_store %arg7[%c0_75, %c3_76, %c0_77], %179 {strides = array<i32>} : memref<1x6x128xf32, #tpu.memory_space<vmem>>, vector<1x1x128xf32>,
    %c0_78 = arith.constant 0 : index
    %c0_79 = arith.constant 0 : index
    %c2_80 = arith.constant 2 : index
    %c0_81 = arith.constant 0 : index
    %180 = vector.load %arg5[%c0_78, %c0_79, %c2_80, %c0_81] : memref<1x3x3x128xf32, #tpu.memory_space<vmem>>, vector<1x1x1x128xf32>
    %181 = vector.shape_cast %180 : vector<1x1x1x128xf32> to vector<1x128xf32>
    %182 = vector.broadcast %48 : f32 to vector<1x128xf32>
    %183 = arith.subf %181, %182 : vector<1x128xf32>
    %c0_82 = arith.constant 0 : index
    %c1_83 = arith.constant 1 : index
    %c2_84 = arith.constant 2 : index
    %c0_85 = arith.constant 0 : index
    %184 = vector.load %arg5[%c0_82, %c1_83, %c2_84, %c0_85] : memref<1x3x3x128xf32, #tpu.memory_space<vmem>>, vector<1x1x1x128xf32>
    %185 = vector.shape_cast %184 : vector<1x1x1x128xf32> to vector<1x128xf32>
    %186 = vector.broadcast %52 : f32 to vector<1x128xf32>
    %187 = arith.subf %185, %186 : vector<1x128xf32>
    %c0_86 = arith.constant 0 : index
    %c2_87 = arith.constant 2 : index
    %c2_88 = arith.constant 2 : index
    %c0_89 = arith.constant 0 : index
    %188 = vector.load %arg5[%c0_86, %c2_87, %c2_88, %c0_89] : memref<1x3x3x128xf32, #tpu.memory_space<vmem>>, vector<1x1x1x128xf32>
    %189 = vector.shape_cast %188 : vector<1x1x1x128xf32> to vector<1x128xf32>
    %190 = vector.broadcast %56 : f32 to vector<1x128xf32>
    %191 = arith.subf %189, %190 : vector<1x128xf32>
    %192 = vector.broadcast %4 : f32 to vector<1x128xf32>
    %193 = arith.mulf %192, %183 : vector<1x128xf32>
    %194 = vector.broadcast %9 : f32 to vector<1x128xf32>
    %195 = arith.mulf %194, %187 : vector<1x128xf32>
    %196 = arith.addf %193, %195 : vector<1x128xf32>
    %197 = vector.broadcast %14 : f32 to vector<1x128xf32>
    %198 = arith.mulf %197, %191 : vector<1x128xf32>
    %199 = arith.addf %196, %198 : vector<1x128xf32>
    %200 = vector.broadcast %19 : f32 to vector<1x128xf32>
    %201 = arith.mulf %200, %183 : vector<1x128xf32>
    %202 = vector.broadcast %24 : f32 to vector<1x128xf32>
    %203 = arith.mulf %202, %187 : vector<1x128xf32>
    %204 = arith.addf %201, %203 : vector<1x128xf32>
    %205 = vector.broadcast %29 : f32 to vector<1x128xf32>
    %206 = arith.mulf %205, %191 : vector<1x128xf32>
    %207 = arith.addf %204, %206 : vector<1x128xf32>
    %208 = vector.broadcast %34 : f32 to vector<1x128xf32>
    %209 = arith.mulf %208, %183 : vector<1x128xf32>
    %210 = vector.broadcast %39 : f32 to vector<1x128xf32>
    %211 = arith.mulf %210, %187 : vector<1x128xf32>
    %212 = arith.addf %209, %211 : vector<1x128xf32>
    %213 = vector.broadcast %44 : f32 to vector<1x128xf32>
    %214 = arith.mulf %213, %191 : vector<1x128xf32>
    %215 = arith.addf %212, %214 : vector<1x128xf32>
    %c0_90 = arith.constant 0 : index
    %c6 = arith.constant 6 : index
    %c0_91 = arith.constant 0 : index
    %216 = vector.load %arg6[%c0_90, %c6, %c0_91] : memref<1x9x128xf32, #tpu.memory_space<vmem>>, vector<1x1x128xf32>
    %217 = vector.shape_cast %216 : vector<1x1x128xf32> to vector<1x128xf32>
    %218 = vector.shape_cast %199 : vector<1x128xf32> to vector<1x1x128xf32>
    tpu.vector_store %arg6[%c0_90, %c6, %c0_91], %218 {strides = array<i32>} : memref<1x9x128xf32, #tpu.memory_space<vmem>>, vector<1x1x128xf32>,
    %c0_92 = arith.constant 0 : index
    %c7 = arith.constant 7 : index
    %c0_93 = arith.constant 0 : index
    %219 = vector.load %arg6[%c0_92, %c7, %c0_93] : memref<1x9x128xf32, #tpu.memory_space<vmem>>, vector<1x1x128xf32>
    %220 = vector.shape_cast %219 : vector<1x1x128xf32> to vector<1x128xf32>
    %221 = vector.shape_cast %207 : vector<1x128xf32> to vector<1x1x128xf32>
    tpu.vector_store %arg6[%c0_92, %c7, %c0_93], %221 {strides = array<i32>} : memref<1x9x128xf32, #tpu.memory_space<vmem>>, vector<1x1x128xf32>,
    %c0_94 = arith.constant 0 : index
    %c8 = arith.constant 8 : index
    %c0_95 = arith.constant 0 : index
    %222 = vector.load %arg6[%c0_94, %c8, %c0_95] : memref<1x9x128xf32, #tpu.memory_space<vmem>>, vector<1x1x128xf32>
    %223 = vector.shape_cast %222 : vector<1x1x128xf32> to vector<1x128xf32>
    %224 = vector.shape_cast %215 : vector<1x128xf32> to vector<1x1x128xf32>
    tpu.vector_store %arg6[%c0_94, %c8, %c0_95], %224 {strides = array<i32>} : memref<1x9x128xf32, #tpu.memory_space<vmem>>, vector<1x1x128xf32>,
    %225 = vector.broadcast %59 : f32 to vector<1x128xf32>
    %226 = arith.mulf %215, %225 : vector<1x128xf32>
    %227 = tpu.reciprocal %226 : vector<1x128xf32> -> vector<1x128xf32>
    %228 = vector.broadcast %57 : f32 to vector<1x128xf32>
    %229 = arith.mulf %199, %228 : vector<1x128xf32>
    %230 = arith.mulf %229, %227 : vector<1x128xf32>
    %c0_96 = arith.constant 0 : index
    %c4_97 = arith.constant 4 : index
    %c0_98 = arith.constant 0 : index
    %231 = vector.load %arg7[%c0_96, %c4_97, %c0_98] : memref<1x6x128xf32, #tpu.memory_space<vmem>>, vector<1x1x128xf32>
    %232 = vector.shape_cast %231 : vector<1x1x128xf32> to vector<1x128xf32>
    %233 = vector.shape_cast %230 : vector<1x128xf32> to vector<1x1x128xf32>
    tpu.vector_store %arg7[%c0_96, %c4_97, %c0_98], %233 {strides = array<i32>} : memref<1x6x128xf32, #tpu.memory_space<vmem>>, vector<1x1x128xf32>,
    %234 = vector.broadcast %58 : f32 to vector<1x128xf32>
    %235 = arith.mulf %207, %234 : vector<1x128xf32>
    %236 = arith.mulf %235, %227 : vector<1x128xf32>
    %c0_99 = arith.constant 0 : index
    %c5_100 = arith.constant 5 : index
    %c0_101 = arith.constant 0 : index
    %237 = vector.load %arg7[%c0_99, %c5_100, %c0_101] : memref<1x6x128xf32, #tpu.memory_space<vmem>>, vector<1x1x128xf32>
    %238 = vector.shape_cast %237 : vector<1x1x128xf32> to vector<1x128xf32>
    %239 = vector.shape_cast %236 : vector<1x128xf32> to vector<1x1x128xf32>
    tpu.vector_store %arg7[%c0_99, %c5_100, %c0_101], %239 {strides = array<i32>} : memref<1x6x128xf32, #tpu.memory_space<vmem>>, vector<1x1x128xf32>,
    %240 = arith.subf %139, %79 : vector<1x128xf32>
    %241 = arith.subf %147, %87 : vector<1x128xf32>
    %242 = arith.subf %155, %95 : vector<1x128xf32>
    %243 = arith.subf %199, %79 : vector<1x128xf32>
    %244 = arith.subf %207, %87 : vector<1x128xf32>
    %245 = arith.subf %215, %95 : vector<1x128xf32>
    %246 = arith.mulf %241, %245 : vector<1x128xf32>
    %247 = arith.mulf %242, %244 : vector<1x128xf32>
    %248 = arith.subf %246, %247 : vector<1x128xf32>
    %249 = arith.mulf %242, %243 : vector<1x128xf32>
    %250 = arith.mulf %240, %245 : vector<1x128xf32>
    %251 = arith.subf %249, %250 : vector<1x128xf32>
    %252 = arith.mulf %240, %244 : vector<1x128xf32>
    %253 = arith.mulf %241, %243 : vector<1x128xf32>
    %254 = arith.subf %252, %253 : vector<1x128xf32>
    %c0_102 = arith.constant 0 : index
    %c0_103 = arith.constant 0 : index
    %c0_104 = arith.constant 0 : index
    %255 = vector.load %arg8[%c0_102, %c0_103, %c0_104] : memref<1x1x128xf32, #tpu.memory_space<vmem>>, vector<1x1x128xf32>
    %256 = vector.shape_cast %255 : vector<1x1x128xf32> to vector<1x128xf32>
    %257 = vector.shape_cast %254 : vector<1x128xf32> to vector<1x1x128xf32>
    tpu.vector_store %arg8[%c0_102, %c0_103, %c0_104], %257 {strides = array<i32>} : memref<1x1x128xf32, #tpu.memory_space<vmem>>, vector<1x1x128xf32>,
    %258 = arith.mulf %248, %248 : vector<1x128xf32>
    %259 = arith.mulf %251, %251 : vector<1x128xf32>
    %260 = arith.addf %258, %259 : vector<1x128xf32>
    %261 = arith.mulf %254, %254 : vector<1x128xf32>
    %262 = arith.addf %260, %261 : vector<1x128xf32>
    %263 = math.sqrt %262 : vector<1x128xf32>
    %cst = arith.constant 1.000000e-15 : f32
    %264 = vector.broadcast %cst : f32 to vector<1x128xf32>
    %265 = arith.addf %263, %264 : vector<1x128xf32>
    %266 = tpu.reciprocal %265 : vector<1x128xf32> -> vector<1x128xf32>
    %267 = arith.mulf %248, %266 : vector<1x128xf32>
    %c0_105 = arith.constant 0 : index
    %c0_106 = arith.constant 0 : index
    %c0_107 = arith.constant 0 : index
    %268 = vector.load %arg9[%c0_105, %c0_106, %c0_107] : memref<1x3x128xf32, #tpu.memory_space<vmem>>, vector<1x1x128xf32>
    %269 = vector.shape_cast %268 : vector<1x1x128xf32> to vector<1x128xf32>
    %270 = vector.shape_cast %267 : vector<1x128xf32> to vector<1x1x128xf32>
    tpu.vector_store %arg9[%c0_105, %c0_106, %c0_107], %270 {strides = array<i32>} : memref<1x3x128xf32, #tpu.memory_space<vmem>>, vector<1x1x128xf32>,
    %271 = arith.mulf %251, %266 : vector<1x128xf32>
    %c0_108 = arith.constant 0 : index
    %c1_109 = arith.constant 1 : index
    %c0_110 = arith.constant 0 : index
    %272 = vector.load %arg9[%c0_108, %c1_109, %c0_110] : memref<1x3x128xf32, #tpu.memory_space<vmem>>, vector<1x1x128xf32>
    %273 = vector.shape_cast %272 : vector<1x1x128xf32> to vector<1x128xf32>
    %274 = vector.shape_cast %271 : vector<1x128xf32> to vector<1x1x128xf32>
    tpu.vector_store %arg9[%c0_108, %c1_109, %c0_110], %274 {strides = array<i32>} : memref<1x3x128xf32, #tpu.memory_space<vmem>>, vector<1x1x128xf32>,
    %275 = arith.mulf %254, %266 : vector<1x128xf32>
    %c0_111 = arith.constant 0 : index
    %c2_112 = arith.constant 2 : index
    %c0_113 = arith.constant 0 : index
    %276 = vector.load %arg9[%c0_111, %c2_112, %c0_113] : memref<1x3x128xf32, #tpu.memory_space<vmem>>, vector<1x1x128xf32>
    %277 = vector.shape_cast %276 : vector<1x1x128xf32> to vector<1x128xf32>
    %278 = vector.shape_cast %275 : vector<1x128xf32> to vector<1x1x128xf32>
    tpu.vector_store %arg9[%c0_111, %c2_112, %c0_113], %278 {strides = array<i32>} : memref<1x3x128xf32, #tpu.memory_space<vmem>>, vector<1x1x128xf32>,
    return
  }
  func.func @transform_0(%arg0: i32, %arg1: i32) -> i32 {
    %c0_i32 = arith.constant 0 : i32
    %c0_i32_0 = arith.constant 0 : i32
    return %c0_i32 : i32
  }
  func.func @transform_1(%arg0: i32, %arg1: i32) -> i32 {
    %c0_i32 = arith.constant 0 : i32
    %c0_i32_0 = arith.constant 0 : i32
    return %c0_i32 : i32
  }
  func.func @transform_2(%arg0: i32, %arg1: i32) -> i32 {
    %c0_i32 = arith.constant 0 : i32
    %c0_i32_0 = arith.constant 0 : i32
    return %c0_i32 : i32
  }
  func.func @transform_3(%arg0: i32, %arg1: i32) -> (i32, i32, i32, i32) {
    %c0_i32 = arith.constant 0 : i32
    %c0_i32_0 = arith.constant 0 : i32
    %c0_i32_1 = arith.constant 0 : i32
    return %arg0, %c0_i32, %c0_i32_0, %arg1 : i32, i32, i32, i32
  }
  func.func @transform_4(%arg0: i32, %arg1: i32) -> (i32, i32, i32) {
    %c0_i32 = arith.constant 0 : i32
    %c0_i32_0 = arith.constant 0 : i32
    return %arg0, %c0_i32, %arg1 : i32, i32, i32
  }
  func.func @transform_5(%arg0: i32, %arg1: i32) -> (i32, i32, i32) {
    %c0_i32 = arith.constant 0 : i32
    %c0_i32_0 = arith.constant 0 : i32
    return %arg0, %c0_i32, %arg1 : i32, i32, i32
  }
  func.func @transform_6(%arg0: i32, %arg1: i32) -> (i32, i32, i32) {
    %c0_i32 = arith.constant 0 : i32
    %c0_i32_0 = arith.constant 0 : i32
    return %arg0, %c0_i32, %arg1 : i32, i32, i32
  }
  func.func @transform_7(%arg0: i32, %arg1: i32) -> (i32, i32, i32) {
    %c0_i32 = arith.constant 0 : i32
    %c0_i32_0 = arith.constant 0 : i32
    return %arg0, %c0_i32, %arg1 : i32, i32, i32
  }
}

</mosaic_0001>

<llo_original>
// kernel: tpu_custom_call.1
$region0: #{tpu_custom_call.1}
  #allocation0 [shape = 'u32[]', space=smem, size = 0x4, offset = 0x4, fixed_abs, tag = 'smem constant byte address 0x4 - core index']
  #allocation1 [shape = 'u32[144,128]{1,0:T(1,128)}', space=vmem, size = 0x12000, scoped, tag = 'internal scratch']
  %s0 = inlined_call_operand.vmem [shape: f32[18], index: 0, kind: input, shape index: {}]
  %s1 = inlined_call_operand.vmem [shape: f32[6], index: 1, kind: input, shape index: {}]
  %s2 = inlined_call_operand.vmem [shape: f32[3], index: 2, kind: input, shape index: {}]
  %s3 = inlined_call_operand.vmem [shape: f32[2,3,3,128], index: 3, kind: input, shape index: {}]
  %s4 = inlined_call_operand.vmem [shape: f32[2,9,128], index: 4, kind: output, shape index: {0}]
  %s5 = inlined_call_operand.vmem [shape: f32[2,6,128], index: 5, kind: output, shape index: {1}]
  %s6 = inlined_call_operand.hbm [shape: f32[2,1,128], index: 6, kind: output, shape index: {2}]
  %s7 = inlined_call_operand.vmem [shape: f32[2,3,128], index: 7, kind: output, shape index: {3}]
  %8 = xla_tuple %s4, %s5, %s6, %s7
  %s9 = sld [smem:[#allocation0]]
  $region85: #{tpu_custom_call.1} parent=0
    _
  %s11 = ssub.s32 1, %s9
  %s12 = scalar_select 0, %s11, %s9
  $region1: #{tpu_custom_call.1} parent=0
    #allocation2 [shape = 'u8[512]{0}', space=smem, size = 0x200, scoped, tag = 'input window, operand 0, single buffered']
    #allocation3 [shape = 's32[2]{0}', space=sflag, size = 0x8, scoped, tag = 'scoped memory for tpu_custom_call.1']
    #allocation4 [shape = 's32[2]{0}', space=sflag, size = 0x8, scoped, tag = 'scoped memory for tpu_custom_call.1']
    #allocation5 [shape = 'u8[512]{0}', space=smem, size = 0x200, scoped, tag = 'input window, operand 1, single buffered']
    #allocation6 [shape = 's32[1]{0}', space=sflag, size = 0x4, scoped, tag = 'scoped memory for tpu_custom_call.1']
    #allocation7 [shape = 'u8[512]{0}', space=smem, size = 0x200, scoped, tag = 'input window, operand 2, single buffered']
    #allocation8 [shape = 'u8[1024]{0}', space=vmem, size = 0x400, scoped, tag = 'output window, operand 2']
    %13 = vsyncpa [#allocation4], 0
    %14 = vsyncpa [#allocation6], 0
    %15 = vsyncpa [#allocation3], 0
    %s16 = scalar_lea.sflag [#allocation3], 1
    %17 = vsyncpa %s16, 0
    loop: start=0, step=1, limit=4
    $region2: #{tpu_custom_call.1} parent=1 // loop_pre_header
      _
    $region3: #{tpu_custom_call.1} parent=1 // loop_header
      %s19 = sphi 0, %s23
      %p20 = scmp.ge.s32.totalorder %s19, 4
      %s26 = sphi 0, %s38
      %s27 = sphi 0, %s34
      %s28 = sphi 0, %s26
      %s29 = sphi 0, %s27
      %s30 = sphi 0, %s28
      %s31 = sphi 0, %s29
      %s39 = sphi 0, %s39
      %s41 = sphi 0, %s39
      %s42 = sphi 0, %s41
      %s56 = sphi 0, %s42
      %s60 = sphi 0, %s60
      %s62 = sphi 0, %s60
      %s63 = sphi 0, %s62
      %s77 = sphi 0, %s63
      %s81 = sphi 0, %s81
      %s83 = sphi 0, %s81
      %s84 = sphi 0, %s83
      %s98 = sphi 0, %s84
      %s106 = sphi 0, %s108
      %s109 = sphi 0, %s106
      %s110 = sphi 0, %s109
      %s126 = sphi 0, %s110
      %s134 = sphi 0, %s136
      %s137 = sphi 0, %s134
      %s138 = sphi 0, %s137
      %s154 = sphi 0, %s138
      %s162 = sphi 0, %s164
      %s165 = sphi 0, %s162
      %s166 = sphi 0, %s165
      %s182 = sphi 0, %s166
      %s190 = sphi 0, %s192
      %s193 = sphi 0, %s190
      %s194 = sphi 0, %s193
      %s210 = sphi 0, %s194
      %s218 = sphi 0, %s220
      %s221 = sphi 0, %s218
      %s222 = sphi 0, %s221
      %s238 = sphi 0, %s222
    $region4: #{tpu_custom_call.1} parent=1 // loop_header_branch
      %22 = sbr.rel (%p20) target = $region8
    $region5: #{tpu_custom_call.1} parent=1 // loop_body
      %s24 = ssub.s32 %s19, 1
      %s25 = ssub.s32 %s19, 2
      %s32 = sadd.s32 1, %s27
      %p33 = scmp.ge.s32.totalorder %s32, 1
      %s34 = scalar_select %p33, 0, %s32
      %s35 = sadd.s32 1, %s26
      %s36 = scalar_select %p33, %s35, %s26
      %p37 = scmp.ge.s32.totalorder %s36, 2
      %s38 = scalar_select %p37, 0, %s36
      %s40 = sadd.s32 %s39, 1
      %p43 = scmp.eq.s32.totalorder %s19, 1
      %p44 = scmp.ne.s32.totalorder %s39, %s41
      %p45 = scmp.eq.s32.totalorder %s19, 0
      %p46 = por %p44, %p45
      %p47 = scmp.ne.s32.totalorder %s39, %s41
      %p48 = scmp.eq.s32.totalorder %s24, 1
      %p49 = por %p47, %p48
      %p50 = scmp.ne.s32.totalorder %s41, %s42
      %p51 = scmp.eq.s32.totalorder %s24, 0
      %p52 = por %p50, %p51
      %p53 = scmp.ne.s32.totalorder %s41, %s42
      %p54 = scmp.eq.s32.totalorder %s25, 1
      %p55 = por %p53, %p54
      %p57 = scmp.ne.s32.totalorder %s42, %s56
      %p58 = scmp.eq.s32.totalorder %s25, 0
      %p59 = por %p57, %p58
      %s61 = sadd.s32 %s60, 1
      %p64 = scmp.eq.s32.totalorder %s19, 1
      %p65 = scmp.ne.s32.totalorder %s60, %s62
      %p66 = scmp.eq.s32.totalorder %s19, 0
      %p67 = por %p65, %p66
      %p68 = scmp.ne.s32.totalorder %s60, %s62
      %p69 = scmp.eq.s32.totalorder %s24, 1
      %p70 = por %p68, %p69
      %p71 = scmp.ne.s32.totalorder %s62, %s63
      %p72 = scmp.eq.s32.totalorder %s24, 0
      %p73 = por %p71, %p72
      %p74 = scmp.ne.s32.totalorder %s62, %s63
      %p75 = scmp.eq.s32.totalorder %s25, 1
      %p76 = por %p74, %p75
      %p78 = scmp.ne.s32.totalorder %s63, %s77
      %p79 = scmp.eq.s32.totalorder %s25, 0
      %p80 = por %p78, %p79
      %s82 = sadd.s32 %s81, 1
      %p85 = scmp.eq.s32.totalorder %s19, 1
      %p86 = scmp.ne.s32.totalorder %s81, %s83
      %p87 = scmp.eq.s32.totalorder %s19, 0
      %p88 = por %p86, %p87
      %p89 = scmp.ne.s32.totalorder %s81, %s83
      %p90 = scmp.eq.s32.totalorder %s24, 1
      %p91 = por %p89, %p90
      %p92 = scmp.ne.s32.totalorder %s83, %s84
      %p93 = scmp.eq.s32.totalorder %s24, 0
      %p94 = por %p92, %p93
      %p95 = scmp.ne.s32.totalorder %s83, %s84
      %p96 = scmp.eq.s32.totalorder %s25, 1
      %p97 = por %p95, %p96
      %p99 = scmp.ne.s32.totalorder %s84, %s98
      %p100 = scmp.eq.s32.totalorder %s25, 0
      %p101 = por %p99, %p100
      %s102 = ssub.s32 %s26, %s38
      %s103 = ssub.s32 %s27, %s34
      %s104 = sor.u32 %s102, %s103
      %p105 = scmp.eq.s32.totalorder %s104, 0
      %s107 = sadd.s32 %s106, 1
      %s108 = scalar_select %p105, %s106, %s107
      %p111 = pneg %p105
      %p112 = scmp.eq.s32.totalorder %s19, 1
      %p113 = por %p111, %p112
      %p114 = scmp.ne.s32.totalorder %s106, %s109
      %p115 = scmp.eq.s32.totalorder %s19, 0
      %p116 = por %p114, %p115
      %p117 = scmp.ne.s32.totalorder %s106, %s109
      %p118 = scmp.eq.s32.totalorder %s24, 1
      %p119 = por %p117, %p118
      %p120 = scmp.ne.s32.totalorder %s109, %s110
      %p121 = scmp.eq.s32.totalorder %s24, 0
      %p122 = por %p120, %p121
      %p123 = scmp.ne.s32.totalorder %s109, %s110
      %p124 = scmp.eq.s32.totalorder %s25, 1
      %p125 = por %p123, %p124
      %p127 = scmp.ne.s32.totalorder %s110, %s126
      %p128 = scmp.eq.s32.totalorder %s25, 0
      %p129 = por %p127, %p128
      %s130 = ssub.s32 %s26, %s38
      %s131 = ssub.s32 %s27, %s34
      %s132 = sor.u32 %s130, %s131
      %p133 = scmp.eq.s32.totalorder %s132, 0
      %s135 = sadd.s32 %s134, 1
      %s136 = scalar_select %p133, %s134, %s135
      %p139 = pneg %p133
      %p140 = scmp.eq.s32.totalorder %s19, 1
      %p141 = por %p139, %p140
      %p142 = scmp.ne.s32.totalorder %s134, %s137
      %p143 = scmp.eq.s32.totalorder %s19, 0
      %p144 = por %p142, %p143
      %p145 = scmp.ne.s32.totalorder %s134, %s137
      %p146 = scmp.eq.s32.totalorder %s24, 1
      %p147 = por %p145, %p146
      %p148 = scmp.ne.s32.totalorder %s137, %s138
      %p149 = scmp.eq.s32.totalorder %s24, 0
      %p150 = por %p148, %p149
      %p151 = scmp.ne.s32.totalorder %s137, %s138
      %p152 = scmp.eq.s32.totalorder %s25, 1
      %p153 = por %p151, %p152
      %p155 = scmp.ne.s32.totalorder %s138, %s154
      %p156 = scmp.eq.s32.totalorder %s25, 0
      %p157 = por %p155, %p156
      %s158 = ssub.s32 %s26, %s38
      %s159 = ssub.s32 %s27, %s34
      %s160 = sor.u32 %s158, %s159
      %p161 = scmp.eq.s32.totalorder %s160, 0
      %s163 = sadd.s32 %s162, 1
      %s164 = scalar_select %p161, %s162, %s163
      %p167 = pneg %p161
      %p168 = scmp.eq.s32.totalorder %s19, 1
      %p169 = por %p167, %p168
      %p170 = scmp.ne.s32.totalorder %s162, %s165
      %p171 = scmp.eq.s32.totalorder %s19, 0
      %p172 = por %p170, %p171
      %p173 = scmp.ne.s32.totalorder %s162, %s165
      %p174 = scmp.eq.s32.totalorder %s24, 1
      %p175 = por %p173, %p174
      %p176 = scmp.ne.s32.totalorder %s165, %s166
      %p177 = scmp.eq.s32.totalorder %s24, 0
      %p178 = por %p176, %p177
      %p179 = scmp.ne.s32.totalorder %s165, %s166
      %p180 = scmp.eq.s32.totalorder %s25, 1
      %p181 = por %p179, %p180
      %p183 = scmp.ne.s32.totalorder %s166, %s182
      %p184 = scmp.eq.s32.totalorder %s25, 0
      %p185 = por %p183, %p184
      %s186 = ssub.s32 %s26, %s38
      %s187 = ssub.s32 %s27, %s34
      %s188 = sor.u32 %s186, %s187
      %p189 = scmp.eq.s32.totalorder %s188, 0
      %s191 = sadd.s32 %s190, 1
      %s192 = scalar_select %p189, %s190, %s191
      %p195 = pneg %p189
      %p196 = scmp.eq.s32.totalorder %s19, 1
      %p197 = por %p195, %p196
      %p198 = scmp.ne.s32.totalorder %s190, %s193
      %p199 = scmp.eq.s32.totalorder %s19, 0
      %p200 = por %p198, %p199
      %p201 = scmp.ne.s32.totalorder %s190, %s193
      %p202 = scmp.eq.s32.totalorder %s24, 1
      %p203 = por %p201, %p202
      %p204 = scmp.ne.s32.totalorder %s193, %s194
      %p205 = scmp.eq.s32.totalorder %s24, 0
      %p206 = por %p204, %p205
      %p207 = scmp.ne.s32.totalorder %s193, %s194
      %p208 = scmp.eq.s32.totalorder %s25, 1
      %p209 = por %p207, %p208
      %p211 = scmp.ne.s32.totalorder %s194, %s210
      %p212 = scmp.eq.s32.totalorder %s25, 0
      %p213 = por %p211, %p212
      %s214 = ssub.s32 %s26, %s38
      %s215 = ssub.s32 %s27, %s34
      %s216 = sor.u32 %s214, %s215
      %p217 = scmp.eq.s32.totalorder %s216, 0
      %s219 = sadd.s32 %s218, 1
      %s220 = scalar_select %p217, %s218, %s219
      %p223 = pneg %p217
      %p224 = scmp.eq.s32.totalorder %s19, 1
      %p225 = por %p223, %p224
      %p226 = scmp.ne.s32.totalorder %s218, %s221
      %p227 = scmp.eq.s32.totalorder %s19, 0
      %p228 = por %p226, %p227
      %p229 = scmp.ne.s32.totalorder %s218, %s221
      %p230 = scmp.eq.s32.totalorder %s24, 1
      %p231 = por %p229, %p230
      %p232 = scmp.ne.s32.totalorder %s221, %s222
      %p233 = scmp.eq.s32.totalorder %s24, 0
      %p234 = por %p232, %p233
      %p235 = scmp.ne.s32.totalorder %s221, %s222
      %p236 = scmp.eq.s32.totalorder %s25, 1
      %p237 = por %p235, %p236
      %p239 = scmp.ne.s32.totalorder %s222, %s238
      %p240 = scmp.eq.s32.totalorder %s25, 0
      %p241 = por %p239, %p240
      %p242 = scmp.le.s32.totalorder 1, %s19
      %p243 = scmp.lt.s32.totalorder %s19, 3
      %p244 = pnand %p242, %p243
      %p245 = pneg %p244
      // Predicated region
      $region9: #{tpu_custom_call.1} parent=5 // pred_check
        _
      $region10: #{tpu_custom_call.1} parent=5 // pred_check_branch
        %247 = sbr.rel (%p244) target = $region12
      $region11: #{tpu_custom_call.1} parent=5 // pred_region
        %s248 = ssub.s32 %s19, 1
        // Predicated region
        $region13: #{tpu_custom_call.1} parent=11 // pred_check
          %p249 = pneg %p52
        $region14: #{tpu_custom_call.1} parent=11 // pred_check_branch
          %251 = sbr.rel (%p249) target = $region16
        $region15: #{tpu_custom_call.1} parent=11 // pred_region
          %s253 = ssub.s32 16, 16
          %254 = vsyncadd [#allocation4], %s253
          %s256 = sshll.u32 %s0, 4
          %s257 = int_to_ptr.vmem [resolvable:$true] %s256
          %259 = dma.vmem_to_smem %s257, 16, [#allocation2], [#allocation4]
        $region16: #{tpu_custom_call.1} parent=11 // pred_fallthru
          _
        // Predicated region
        $region17: #{tpu_custom_call.1} parent=11 // pred_check
          %p260 = pneg %p73
        $region18: #{tpu_custom_call.1} parent=11 // pred_check_branch
          %262 = sbr.rel (%p260) target = $region20
        $region19: #{tpu_custom_call.1} parent=11 // pred_region
          %s264 = ssub.s32 16, 16
          %265 = vsyncadd [#allocation6], %s264
          %s267 = sshll.u32 %s1, 4
          %s268 = int_to_ptr.vmem [resolvable:$true] %s267
          %270 = dma.vmem_to_smem %s268, 16, [#allocation5], [#allocation6]
        $region20: #{tpu_custom_call.1} parent=11 // pred_fallthru
          _
        // Predicated region
        $region21: #{tpu_custom_call.1} parent=11 // pred_check
          %p271 = pneg %p94
        $region22: #{tpu_custom_call.1} parent=11 // pred_check_branch
          %273 = sbr.rel (%p271) target = $region24
        $region23: #{tpu_custom_call.1} parent=11 // pred_region
          %s275 = ssub.s32 16, 16
          %276 = vsyncadd [#allocation6], %s275
          %s278 = sshll.u32 %s2, 4
          %s279 = int_to_ptr.vmem [resolvable:$true] %s278
          %281 = dma.vmem_to_smem %s279, 16, [#allocation7], [#allocation6]
        $region24: #{tpu_custom_call.1} parent=11 // pred_fallthru
          _
      $region12: #{tpu_custom_call.1} parent=5 // pred_fallthru
        _
      %p282 = scmp.lt.s32.totalorder %s19, 2
      // Predicated region
      $region25: #{tpu_custom_call.1} parent=5 // pred_check
        %p283 = pneg %p282
      $region26: #{tpu_custom_call.1} parent=5 // pred_check_branch
        %285 = sbr.rel (%p283) target = $region28
      $region27: #{tpu_custom_call.1} parent=5 // pred_region
        // Predicated region
        $region29: #{tpu_custom_call.1} parent=27 // pred_check
          %p286 = pneg %p116
        $region30: #{tpu_custom_call.1} parent=27 // pred_check_branch
          %288 = sbr.rel (%p286) target = $region32
        $region31: #{tpu_custom_call.1} parent=27 // pred_region
          %p289 = scmp.lt.s32.totalorder %s26, 1
          %s290 = scalar_select %p289, %s26, 1
          %p291 = scmp.lt.s32.totalorder %s27, 0
          %s292 = scalar_select %p291, %s27, 0
          %s293 = smul.addr %s290, 3
          %s294 = sadd.s32 %s292, %s293
          %s295 = smul.addr %s294, 4
          %s296 = scalar_lea.vmem %s3, %s295
        $region32: #{tpu_custom_call.1} parent=27 // pred_fallthru
          _
      $region28: #{tpu_custom_call.1} parent=5 // pred_fallthru
        _
      %p297 = scmp.le.s32.totalorder 1, %s19
      %p298 = scmp.lt.s32.totalorder %s19, 3
      %p299 = pnand %p297, %p298
      %p300 = pneg %p299
      // Predicated region
      $region33: #{tpu_custom_call.1} parent=5 // pred_check
        _
      $region34: #{tpu_custom_call.1} parent=5 // pred_check_branch
        %302 = sbr.rel (%p299) target = $region36
      $region35: #{tpu_custom_call.1} parent=5 // pred_region
        %s303 = ssub.s32 %s19, 1
        // Predicated region
        $region37: #{tpu_custom_call.1} parent=35 // pred_check
          %p304 = pneg %p52
        $region38: #{tpu_custom_call.1} parent=35 // pred_check_branch
          %306 = sbr.rel (%p304) target = $region40
        $region39: #{tpu_custom_call.1} parent=35 // pred_region
          %307 = dma.done [#allocation4], 16
        $region40: #{tpu_custom_call.1} parent=35 // pred_fallthru
          _
        // Predicated region
        $region41: #{tpu_custom_call.1} parent=35 // pred_check
          %p308 = pneg %p73
        $region42: #{tpu_custom_call.1} parent=35 // pred_check_branch
          %310 = sbr.rel (%p308) target = $region44
        $region43: #{tpu_custom_call.1} parent=35 // pred_region
          %311 = dma.done [#allocation6], 16
        $region44: #{tpu_custom_call.1} parent=35 // pred_fallthru
          _
        // Predicated region
        $region45: #{tpu_custom_call.1} parent=35 // pred_check
          %p312 = pneg %p94
        $region46: #{tpu_custom_call.1} parent=35 // pred_check_branch
          %314 = sbr.rel (%p312) target = $region48
        $region47: #{tpu_custom_call.1} parent=35 // pred_region
          %315 = dma.done [#allocation6], 16
        $region48: #{tpu_custom_call.1} parent=35 // pred_fallthru
          _
        %316 = sfence
        %p317 = pneg %p52
        %p318 = pneg %p49
        %p319 = pneg %p73
        %p320 = pneg %p70
        %p321 = pneg %p94
        %p322 = pneg %p91
        %p323 = scmp.lt.s32.totalorder %s28, 1
        %s324 = scalar_select %p323, %s28, 1
        %p325 = scmp.lt.s32.totalorder %s29, 0
        %s326 = scalar_select %p325, %s29, 0
        %s327 = smul.addr %s324, 3
        %s328 = sadd.s32 %s326, %s327
        %s329 = smul.addr %s328, 4
        %s330 = scalar_lea.vmem %s3, %s329
        %p331 = pneg %p122
        %p332 = pneg %p119
        %p333 = pneg %p150
        %p334 = pneg %p147
        %p335 = scmp.lt.s32.totalorder %s28, 1
        %s336 = scalar_select %p335, %s28, 1
        %p337 = scmp.lt.s32.totalorder %s29, 0
        %s338 = scalar_select %p337, %s29, 0
        %s339 = smul.addr %s336, 2
        %s340 = sadd.s32 %s338, %s339
        %s341 = smul.addr %s340, 8
        %s342 = scalar_lea.vmem %s4, %s341
        %p343 = pneg %p178
        %p344 = pneg %p175
        %p345 = scmp.lt.s32.totalorder %s28, 1
        %s346 = scalar_select %p345, %s28, 1
        %p347 = scmp.lt.s32.totalorder %s29, 0
        %s348 = scalar_select %p347, %s29, 0
        %s349 = sadd.s32 %s348, %s346
        %s350 = smul.addr %s349, 8
        %s351 = scalar_lea.vmem %s5, %s350
        %p352 = pneg %p206
        %p353 = pneg %p203
        %s354 = sand.u32 %s193, 1
        %s355 = scalar_lea.sflag [#allocation3], %s354
        %s356 = sand.u32 %s193, 1
        %s357 = scalar_lea.vmem [#allocation8], %s356
        %p358 = pneg %p234
        %p359 = pneg %p231
        %p360 = scmp.lt.s32.totalorder %s28, 1
        %s361 = scalar_select %p360, %s28, 1
        %p362 = scmp.lt.s32.totalorder %s29, 0
        %s363 = scalar_select %p362, %s29, 0
        %s364 = sadd.s32 %s363, %s361
        %s365 = smul.addr %s364, 4
        %s366 = scalar_lea.vmem %s7, %s365
        %p367 = scmp.lt.s32.totalorder %s28, 1
        %s368 = scalar_select %p367, %s28, 1
        %p369 = scmp.lt.s32.totalorder %s29, 0
        %s370 = scalar_select %p369, %s29, 0
        %s371 = smul.addr %s368, 3
        %s372 = sadd.s32 %s370, %s371
        %s373 = smul.addr %s372, 4
        %s374 = scalar_lea.vmem %s3, %s373
        %p375 = scmp.lt.s32.totalorder %s28, 1
        %s376 = scalar_select %p375, %s28, 1
        %p377 = scmp.lt.s32.totalorder %s29, 0
        %s378 = scalar_select %p377, %s29, 0
        %s379 = smul.addr %s376, 2
        %s380 = sadd.s32 %s378, %s379
        %s381 = smul.addr %s380, 8
        %s382 = scalar_lea.vmem %s4, %s381
        %p383 = scmp.lt.s32.totalorder %s28, 1
        %s384 = scalar_select %p383, %s28, 1
        %p385 = scmp.lt.s32.totalorder %s29, 0
        %s386 = scalar_select %p385, %s29, 0
        %s387 = sadd.s32 %s386, %s384
        %s388 = smul.addr %s387, 8
        %s389 = scalar_lea.vmem %s5, %s388
        %p390 = scmp.lt.s32.totalorder %s28, 1
        %s391 = scalar_select %p390, %s28, 1
        %p392 = scmp.lt.s32.totalorder %s29, 0
        %s393 = scalar_select %p392, %s29, 0
        %s394 = sadd.s32 %s393, %s391
        %s395 = smul.addr %s394, 4
        %s396 = scalar_lea.vmem %s7, %s395
        %s397 = smul.u32 %s28, 9
        %s398 = sld [smem:[#allocation2 + %s397]]
        %s399 = sadd.s32 %s397, 1
        %s400 = sld [smem:[#allocation2 + %s399]]
        %s401 = sadd.s32 %s397, 2
        %s402 = sld [smem:[#allocation2 + %s401]]
        %s403 = sadd.s32 %s397, 3
        %s404 = sld [smem:[#allocation2 + %s403]]
        %s405 = sadd.s32 %s397, 4
        %s406 = sld [smem:[#allocation2 + %s405]]
        %s407 = sadd.s32 %s397, 5
        %s408 = sld [smem:[#allocation2 + %s407]]
        %s409 = sadd.s32 %s397, 6
        %s410 = sld [smem:[#allocation2 + %s409]]
        %s411 = sadd.s32 %s397, 7
        %s412 = sld [smem:[#allocation2 + %s411]]
        %s413 = sadd.s32 %s397, 8
        %s414 = sld [smem:[#allocation2 + %s413]]
        %s415 = smul.u32 %s28, 3
        %s416 = sld [smem:[#allocation5 + %s415]]
        %s417 = sadd.s32 %s415, 1
        %s418 = sld [smem:[#allocation5 + %s417]]
        %s419 = sadd.s32 %s415, 2
        %s420 = sld [smem:[#allocation5 + %s419]]
        %s421 = sld [smem:[#allocation7]]
        %s422 = sld [smem:[#allocation7 + $0x1]]
        %s423 = sld [smem:[#allocation7 + $0x2]]
        %v424 = vld [vmem:[%s374] sm:$0x1]
        %v425 = vstv %s416
        %v426 = vsub.f32 %v424, %v425
        %s427 = scalar_lea.vmem %s374, 4
        %v428 = vld [vmem:[%s427] sm:$0x1]
        %v429 = vstv %s418
        %v430 = vsub.f32 %v428, %v429
        %s431 = scalar_lea.vmem %s374, 8
        %v432 = vld [vmem:[%s431] sm:$0x1]
        %v433 = vstv %s420
        %v434 = vsub.f32 %v432, %v433
        %v435 = vstv %s398
        %v436 = vmul.f32 %v435, %v426
        %v437 = vstv %s400
        %v438 = vmul.f32 %v437, %v430
        %v439 = vadd.f32 %v436, %v438
        %v440 = vstv %s402
        %v441 = vmul.f32 %v440, %v434
        %v442 = vadd.f32 %v439, %v441
        %v443 = vstv %s404
        %v444 = vmul.f32 %v443, %v426
        %v445 = vstv %s406
        %v446 = vmul.f32 %v445, %v430
        %v447 = vadd.f32 %v444, %v446
        %v448 = vstv %s408
        %v449 = vmul.f32 %v448, %v434
        %v450 = vadd.f32 %v447, %v449
        %v451 = vstv %s410
        %v452 = vmul.f32 %v451, %v426
        %v453 = vstv %s412
        %v454 = vmul.f32 %v453, %v430
        %v455 = vadd.f32 %v452, %v454
        %v456 = vstv %s414
        %v457 = vmul.f32 %v456, %v434
        %v458 = vadd.f32 %v455, %v457
        %459 = vst [vmem:[%s382] sm:$0x1] %v442
        %460 = vst [vmem:[%s382 + $0x1] sm:$0x1] %v450
        %461 = vst [vmem:[%s382 + $0x2] sm:$0x1] %v458
        %v462 = vstv %s423
        %v463 = vmul.f32 %v458, %v462
        %v464 = vrcp.pop %v463
        %v465 = vstv %s421
        %v466 = vmul.f32 %v442, %v465
        %v467 = vmul.f32 %v466, %v464
        %468 = vst [vmem:[%s389] sm:$0x1] %v467
        %v469 = vstv %s422
        %v470 = vmul.f32 %v450, %v469
        %v471 = vmul.f32 %v470, %v464
        %472 = vst [vmem:[%s389 + $0x1] sm:$0x1] %v471
        %v473 = vld [vmem:[%s374 + $0x1] sm:$0x1]
        %v474 = vsub.f32 %v473, %v425
        %v475 = vld [vmem:[%s427 + $0x1] sm:$0x1]
        %v476 = vsub.f32 %v475, %v429
        %v477 = vld [vmem:[%s431 + $0x1] sm:$0x1]
        %v478 = vsub.f32 %v477, %v433
        %v479 = vmul.f32 %v435, %v474
        %v480 = vmul.f32 %v437, %v476
        %v481 = vadd.f32 %v479, %v480
        %v482 = vmul.f32 %v440, %v478
        %v483 = vadd.f32 %v481, %v482
        %v484 = vmul.f32 %v443, %v474
        %v485 = vmul.f32 %v445, %v476
        %v486 = vadd.f32 %v484, %v485
        %v487 = vmul.f32 %v448, %v478
        %v488 = vadd.f32 %v486, %v487
        %v489 = vmul.f32 %v451, %v474
        %v490 = vmul.f32 %v453, %v476
        %v491 = vadd.f32 %v489, %v490
        %v492 = vmul.f32 %v456, %v478
        %v493 = vadd.f32 %v491, %v492
        %494 = vst [vmem:[%s382 + $0x3] sm:$0x1] %v483
        %495 = vst [vmem:[%s382 + $0x4] sm:$0x1] %v488
        %496 = vst [vmem:[%s382 + $0x5] sm:$0x1] %v493
        %v497 = vmul.f32 %v493, %v462
        %v498 = vrcp.pop %v497
        %v499 = vmul.f32 %v483, %v465
        %v500 = vmul.f32 %v499, %v498
        %501 = vst [vmem:[%s389 + $0x2] sm:$0x1] %v500
        %v502 = vmul.f32 %v488, %v469
        %v503 = vmul.f32 %v502, %v498
        %504 = vst [vmem:[%s389 + $0x3] sm:$0x1] %v503
        %v505 = vld [vmem:[%s374 + $0x2] sm:$0x1]
        %v506 = vsub.f32 %v505, %v425
        %v507 = vld [vmem:[%s427 + $0x2] sm:$0x1]
        %v508 = vsub.f32 %v507, %v429
        %v509 = vld [vmem:[%s431 + $0x2] sm:$0x1]
        %v510 = vsub.f32 %v509, %v433
        %v511 = vmul.f32 %v435, %v506
        %v512 = vmul.f32 %v437, %v508
        %v513 = vadd.f32 %v511, %v512
        %v514 = vmul.f32 %v440, %v510
        %v515 = vadd.f32 %v513, %v514
        %v516 = vmul.f32 %v443, %v506
        %v517 = vmul.f32 %v445, %v508
        %v518 = vadd.f32 %v516, %v517
        %v519 = vmul.f32 %v448, %v510
        %v520 = vadd.f32 %v518, %v519
        %v521 = vmul.f32 %v451, %v506
        %v522 = vmul.f32 %v453, %v508
        %v523 = vadd.f32 %v521, %v522
        %v524 = vmul.f32 %v456, %v510
        %v525 = vadd.f32 %v523, %v524
        %526 = vst [vmem:[%s382 + $0x6] sm:$0x1] %v515
        %527 = vst [vmem:[%s382 + $0x7] sm:$0x1] %v520
        %528 = vst [vmem:[%s382 + $0x8] sm:$0x1] %v525
        %v529 = vmul.f32 %v525, %v462
        %v530 = vrcp.pop %v529
        %v531 = vmul.f32 %v515, %v465
        %v532 = vmul.f32 %v531, %v530
        %533 = vst [vmem:[%s389 + $0x4] sm:$0x1] %v532
        %v534 = vmul.f32 %v520, %v469
        %v535 = vmul.f32 %v534, %v530
        %536 = vst [vmem:[%s389 + $0x5] sm:$0x1] %v535
        %v537 = vsub.f32 %v483, %v442
        %v538 = vsub.f32 %v488, %v450
        %v539 = vsub.f32 %v493, %v458
        %v540 = vsub.f32 %v515, %v442
        %v541 = vsub.f32 %v520, %v450
        %v542 = vsub.f32 %v525, %v458
        %v543 = vmul.f32 %v538, %v542
        %v544 = vmul.f32 %v539, %v541
        %v545 = vsub.f32 %v543, %v544
        %v546 = vmul.f32 %v539, %v540
        %v547 = vmul.f32 %v537, %v542
        %v548 = vsub.f32 %v546, %v547
        %v549 = vmul.f32 %v537, %v541
        %v550 = vmul.f32 %v538, %v540
        %v551 = vsub.f32 %v549, %v550
        %552 = vst [vmem:[%s357] sm:$0x1] %v551
        %v553 = vmul.f32 %v545, %v545
        %v554 = vmul.f32 %v548, %v548
        %v555 = vadd.f32 %v553, %v554
        %v556 = vmul.f32 %v551, %v551
        %v557 = vadd.f32 %v555, %v556
        %v558 = vrsqrt.pop %v557
        %v559 = vmul.f32 %v557, %v558
        %vm560 = vcmp.eq.f32.partialorder %v557, inf
        %v561 = vsel %vm560, %v557, %v559
        %vm562 = vcmp.eq.f32.partialorder %v557, 0.0
        %v563 = vand.u32 %v557, 2147483648
        %v564 = vsel %vm562, %v563, %v561
        %v565 = vadd.f32 %v564, 1e-15
        %v566 = vrcp.pop %v565
        %v567 = vmul.f32 %v545, %v566
        %568 = vst [vmem:[%s396] sm:$0x1] %v567
        %v569 = vmul.f32 %v548, %v566
        %570 = vst [vmem:[%s396 + $0x1] sm:$0x1] %v569
        %v571 = vmul.f32 %v551, %v566
        %572 = vst [vmem:[%s396 + $0x2] sm:$0x1] %v571
        %p573 = scmp.lt.s32.totalorder %s28, 1
        %s574 = scalar_select %p573, %s28, 1
        %p575 = scmp.lt.s32.totalorder %s29, 0
        %s576 = scalar_select %p575, %s29, 0
        %s577 = smul.addr %s574, 2
        %s578 = sadd.s32 %s576, %s577
        %s579 = smul.addr %s578, 8
        %s580 = scalar_lea.vmem %s4, %s579
        %p581 = scmp.lt.s32.totalorder %s28, 1
        %s582 = scalar_select %p581, %s28, 1
        %p583 = scmp.lt.s32.totalorder %s29, 0
        %s584 = scalar_select %p583, %s29, 0
        %s585 = sadd.s32 %s584, %s582
        %s586 = smul.addr %s585, 8
        %s587 = scalar_lea.vmem %s5, %s586
        %s588 = sand.u32 %s193, 1
        %s589 = scalar_lea.sflag [#allocation3], %s588
        %s590 = sand.u32 %s193, 1
        %s591 = scalar_lea.vmem [#allocation8], %s590
        %p592 = scmp.lt.s32.totalorder %s28, 1
        %s593 = scalar_select %p592, %s28, 1
        %p594 = scmp.lt.s32.totalorder %s29, 0
        %s595 = scalar_select %p594, %s29, 0
        %s596 = sadd.s32 %s595, %s593
        %s597 = smul.addr %s596, 4
        %s598 = scalar_lea.vmem %s7, %s597
        // Predicated region
        $region49: #{tpu_custom_call.1} parent=35 // pred_check
          %p599 = pneg %p147
        $region50: #{tpu_custom_call.1} parent=35 // pred_check_branch
          %601 = sbr.rel (%p599) target = $region52
        $region51: #{tpu_custom_call.1} parent=35 // pred_region
          _
        $region52: #{tpu_custom_call.1} parent=35 // pred_fallthru
          _
        // Predicated region
        $region53: #{tpu_custom_call.1} parent=35 // pred_check
          %p602 = pneg %p175
        $region54: #{tpu_custom_call.1} parent=35 // pred_check_branch
          %604 = sbr.rel (%p602) target = $region56
        $region55: #{tpu_custom_call.1} parent=35 // pred_region
          _
        $region56: #{tpu_custom_call.1} parent=35 // pred_fallthru
          _
        // Predicated region
        $region57: #{tpu_custom_call.1} parent=35 // pred_check
          %p605 = pneg %p203
        $region58: #{tpu_custom_call.1} parent=35 // pred_check_branch
          %607 = sbr.rel (%p605) target = $region60
        $region59: #{tpu_custom_call.1} parent=35 // pred_region
          %s609 = ssub.s32 16, 16
          %610 = vsyncadd %s589, %s609
          %s611 = sadd.s32 %s29, %s28
          %s612 = smul.addr %s611, 16
          %s613 = scalar_lea.hbm %s6, %s612
          %s615 = sshll.u32 %s591, 4
          %s616 = int_to_ptr.vmem [resolvable:$true] %s615
          %618 = dma.vmem_to_hbm [thread:$0]  %s616, 16, %s613, %s589
        $region60: #{tpu_custom_call.1} parent=35 // pred_fallthru
          _
        // Predicated region
        $region61: #{tpu_custom_call.1} parent=35 // pred_check
          %p619 = pneg %p231
        $region62: #{tpu_custom_call.1} parent=35 // pred_check_branch
          %621 = sbr.rel (%p619) target = $region64
        $region63: #{tpu_custom_call.1} parent=35 // pred_region
          _
        $region64: #{tpu_custom_call.1} parent=35 // pred_fallthru
          _
      $region36: #{tpu_custom_call.1} parent=5 // pred_fallthru
        _
      %p622 = scmp.le.s32.totalorder 2, %s19
      // Predicated region
      $region65: #{tpu_custom_call.1} parent=5 // pred_check
        %p623 = pneg %p622
      $region66: #{tpu_custom_call.1} parent=5 // pred_check_branch
        %625 = sbr.rel (%p623) target = $region68
      $region67: #{tpu_custom_call.1} parent=5 // pred_region
        %s626 = ssub.s32 %s19, 2
        // Predicated region
        $region69: #{tpu_custom_call.1} parent=67 // pred_check
          %p627 = pneg %p153
        $region70: #{tpu_custom_call.1} parent=67 // pred_check_branch
          %629 = sbr.rel (%p627) target = $region72
        $region71: #{tpu_custom_call.1} parent=67 // pred_region
          %p630 = scmp.lt.s32.totalorder %s30, 1
          %s631 = scalar_select %p630, %s30, 1
          %p632 = scmp.lt.s32.totalorder %s31, 0
          %s633 = scalar_select %p632, %s31, 0
          %s634 = smul.addr %s631, 2
          %s635 = sadd.s32 %s633, %s634
          %s636 = smul.addr %s635, 8
          %s637 = scalar_lea.vmem %s4, %s636
        $region72: #{tpu_custom_call.1} parent=67 // pred_fallthru
          _
        // Predicated region
        $region73: #{tpu_custom_call.1} parent=67 // pred_check
          %p638 = pneg %p181
        $region74: #{tpu_custom_call.1} parent=67 // pred_check_branch
          %640 = sbr.rel (%p638) target = $region76
        $region75: #{tpu_custom_call.1} parent=67 // pred_region
          %p641 = scmp.lt.s32.totalorder %s30, 1
          %s642 = scalar_select %p641, %s30, 1
          %p643 = scmp.lt.s32.totalorder %s31, 0
          %s644 = scalar_select %p643, %s31, 0
          %s645 = sadd.s32 %s644, %s642
          %s646 = smul.addr %s645, 8
          %s647 = scalar_lea.vmem %s5, %s646
        $region76: #{tpu_custom_call.1} parent=67 // pred_fallthru
          _
        // Predicated region
        $region77: #{tpu_custom_call.1} parent=67 // pred_check
          %p648 = pneg %p209
        $region78: #{tpu_custom_call.1} parent=67 // pred_check_branch
          %650 = sbr.rel (%p648) target = $region80
        $region79: #{tpu_custom_call.1} parent=67 // pred_region
          %s651 = sand.u32 %s194, 1
          %s652 = scalar_lea.sflag [#allocation3], %s651
          %s653 = sand.u32 %s194, 1
          %s654 = scalar_lea.vmem [#allocation8], %s653
          %655 = dma.done %s652, 16
        $region80: #{tpu_custom_call.1} parent=67 // pred_fallthru
          _
        // Predicated region
        $region81: #{tpu_custom_call.1} parent=67 // pred_check
          %p656 = pneg %p237
        $region82: #{tpu_custom_call.1} parent=67 // pred_check_branch
          %658 = sbr.rel (%p656) target = $region84
        $region83: #{tpu_custom_call.1} parent=67 // pred_region
          %p659 = scmp.lt.s32.totalorder %s30, 1
          %s660 = scalar_select %p659, %s30, 1
          %p661 = scmp.lt.s32.totalorder %s31, 0
          %s662 = scalar_select %p661, %s31, 0
          %s663 = sadd.s32 %s662, %s660
          %s664 = smul.addr %s663, 4
          %s665 = scalar_lea.vmem %s7, %s664
        $region84: #{tpu_custom_call.1} parent=67 // pred_fallthru
          _
      $region68: #{tpu_custom_call.1} parent=5 // pred_fallthru
        _
    $region6: #{tpu_custom_call.1} parent=1 // loop_footer
      %s23 = sadd.s32 1, %s19
    $region7: #{tpu_custom_call.1} parent=1 // loop_footer_branch
      %18 = sbr.rel target = $region3
    $region8: #{tpu_custom_call.1} parent=1 // loop_exit
      _
    %666 = vsyncpa [#allocation3], 1
    %s667 = scalar_lea.sflag [#allocation3], 1
    %668 = vsyncpa %s667, 1
    %669 = vsyncpa [#allocation4], 1
    %s670 = scalar_lea.sflag [#allocation4], 1
    %671 = vsyncpa %s670, 1
    %672 = vsyncpa [#allocation6], 1

</llo_original>
